<compile_context>
chip_gen: v7x
topology: tpu7x:2x2x1
jax: 0.10.0
libtpu: 0.0.40
codegen_flags: <defaults>
</compile_context>

<pallas_src>
import jax
import jax.numpy as jnp
from jax.experimental import pallas as pl
from jax.experimental.pallas import tpu as pltpu

IN_F = 784
H1 = 256
H2 = 128
OUT_F = 10
OUT_PAD = 128         # lane-dense output block width
NEG_BIG = -1e30       # "minus infinity" bias for padded logit lanes


def _round_up(x, m):
    return (x + m - 1) // m * m


def simplenet_kernel(x_ref, w1_ref, b1_ref, w2_ref, b2_ref, w3_ref, b3_ref,
                     o_ref):
    # x_ref: [TB, 784] f32 | weights: bf16 | biases: f32 | o_ref: [TB, 128] bf16
    x = x_ref[...].astype(jnp.bfloat16)        # cast on-chip, feed MXU bf16

    # fc1 + relu (MXU bf16 operands, f32 accumulate)
    h1 = jnp.dot(x, w1_ref[...], preferred_element_type=jnp.float32)
    h1 = jnp.maximum(h1 + b1_ref[...], 0.0)                       # [TB, 256]

    # fc2 + relu
    h2 = jnp.dot(h1.astype(jnp.bfloat16), w2_ref[...],
                 preferred_element_type=jnp.float32)
    h2 = jnp.maximum(h2 + b2_ref[...], 0.0)                       # [TB, 128]

    # fc3 -> 128-wide logits; padded lanes get bias = -1e30 so they drop out
    logits = jnp.dot(h2.astype(jnp.bfloat16), w3_ref[...],
                     preferred_element_type=jnp.float32)
    logits = logits + b3_ref[...]                                 # [TB, 128]

    # numerically-stable log_softmax over the lane axis (f32 math)
    m = jnp.max(logits, axis=-1, keepdims=True)
    shifted = logits - m
    lse = jnp.log(jnp.sum(jnp.exp(shifted), axis=-1, keepdims=True))
    o_ref[...] = (shifted - lse).astype(o_ref.dtype)


def prepare_params(params):
    """Pad / cast the f32 [in, out] params into kernel layout (no fc1 pad)."""
    w1, b1, w2, b2, w3, b3 = params
    w3p = jnp.zeros((H2, OUT_PAD), jnp.float32).at[:, :OUT_F].set(w3)
    b3p = jnp.full((1, OUT_PAD), NEG_BIG, jnp.float32).at[:, :OUT_F].set(b3)
    return (w1.astype(jnp.bfloat16), b1.reshape(1, H1).astype(jnp.float32),
            w2.astype(jnp.bfloat16), b2.reshape(1, H2).astype(jnp.float32),
            w3p.astype(jnp.bfloat16), b3p)


def simplenet_forward(x, kparams, tb_max=2048):
    """x: anything that flattens to [-1, 784] (e.g. [B, 1, 28, 28])."""
    w1, b1, w2, b2, w3p, b3p = kparams
    x2d = x.reshape(-1, IN_F).astype(jnp.float32)
    batch = x2d.shape[0]

    # Pad batch only to the 16-row (bf16 sublane) granule, and only if needed.
    padded_b = _round_up(batch, 16)
    if padded_b != batch:
        x2d = jnp.zeros((padded_b, IN_F), jnp.float32).at[:batch].set(x2d)

    # Large tile (amortize per-step overhead) but guarantee >= 2 grid steps
    # for batches >= 32 so megacore / pipelining actually engage.
    tb = min(tb_max, _round_up(pl.cdiv(padded_b, 2), 16))
    grid = (pl.cdiv(padded_b, tb),)

    flops = 2 * padded_b * (IN_F * H1 + H1 * H2 + H2 * OUT_PAD)
    bytes_accessed = (x2d.size * 4
                      + (w1.size + w2.size + w3p.size) * 2
                      + (b1.size + b2.size + b3p.size) * 4
                      + padded_b * OUT_PAD * 2)

    out = pl.pallas_call(
        simplenet_kernel,
        out_shape=jax.ShapeDtypeStruct((padded_b, OUT_PAD), jnp.bfloat16),
        grid=grid,
        in_specs=[
            pl.BlockSpec((tb, IN_F), lambda i: (i, 0)),        # streamed x
            pl.BlockSpec((IN_F, H1), lambda i: (0, 0)),        # resident w1
            pl.BlockSpec((1, H1), lambda i: (0, 0)),           # resident b1
            pl.BlockSpec((H1, H2), lambda i: (0, 0)),          # resident w2
            pl.BlockSpec((1, H2), lambda i: (0, 0)),           # resident b2
            pl.BlockSpec((H2, OUT_PAD), lambda i: (0, 0)),     # resident w3
            pl.BlockSpec((1, OUT_PAD), lambda i: (0, 0)),      # resident b3
        ],
        out_specs=pl.BlockSpec((tb, OUT_PAD), lambda i: (i, 0)),
        compiler_params=pltpu.CompilerParams(
            dimension_semantics=("parallel",),
            vmem_limit_bytes=48 * 1024 * 1024),
        cost_estimate=pl.CostEstimate(
            flops=flops,
            transcendentals=padded_b * (OUT_PAD + 1),
            bytes_accessed=bytes_accessed),
    )(x2d, w1, b1, w2, b2, w3p, b3p)

    # Drop batch padding and the 118 padded logit lanes.
    return out[:batch, :OUT_F]


def init_params(key):
    """PyTorch-style uniform fan-in init; weights stored [in, out] f32."""
    ks = jax.random.split(key, 6)

    def linear(kw, kb, fan_in, fan_out):
        bound = 1.0 / jnp.sqrt(fan_in)
        w = jax.random.uniform(kw, (fan_in, fan_out), jnp.float32,
                               -bound, bound)
        b = jax.random.uniform(kb, (1, fan_out), jnp.float32, -bound, bound)
        return w, b

    w1, b1 = linear(ks[0], ks[1], IN_F, H1)
    w2, b2 = linear(ks[2], ks[3], H1, H2)
    w3, b3 = linear(ks[4], ks[5], H2, OUT_F)
    return (w1, b1, w2, b2, w3, b3)


def reference_forward(x, params):
    w1, b1, w2, b2, w3, b3 = params
    x2d = x.reshape(-1, IN_F).astype(jnp.float32)
    h1 = jnp.maximum(x2d @ w1 + b1, 0.0)
    h2 = jnp.maximum(h1 @ w2 + b2, 0.0)
    logits = h2 @ w3 + b3
    return jax.nn.log_softmax(logits, axis=1)


if __name__ == "__main__":
    key = jax.random.PRNGKey(0)
    k_param, k_x = jax.random.split(key)

    params = init_params(k_param)
    kparams = prepare_params(params)

    # MNIST-like input: batch=2, NCHW [2, 1, 28, 28]; the forward flattens it.
    x = jax.random.normal(k_x, (2, 1, 28, 28), jnp.float32)

    out = simplenet_forward(x, kparams)
    out = jax.block_until_ready(out)

    ref = reference_forward(x, params)
    assert out.shape == (2, 10)
    # bf16 matmul operands + bf16 output store => loosened tolerance vs f32 ref.
    assert jnp.allclose(out.astype(jnp.float32), ref, atol=1e-1, rtol=1e-1), (
        float(jnp.max(jnp.abs(out.astype(jnp.float32) - ref))))

    print("KERNEL_OK")
</pallas_src>

<mosaic_0001>
module attributes {stable_mosaic.version = 11 : i64} {
  func.func @simplenet_kernel(%arg0: i32, %arg1: memref<16x784xf32, #tpu.memory_space<vmem>>, %arg2: memref<784x256xbf16, #tpu.memory_space<vmem>>, %arg3: memref<1x256xf32, #tpu.memory_space<vmem>>, %arg4: memref<256x128xbf16, #tpu.memory_space<vmem>>, %arg5: memref<1x128xf32, #tpu.memory_space<vmem>>, %arg6: memref<128x128xbf16, #tpu.memory_space<vmem>>, %arg7: memref<1x128xf32, #tpu.memory_space<vmem>>, %arg8: memref<16x128xbf16, #tpu.memory_space<vmem>>) attributes {dimension_semantics = [#tpu.dimension_semantics<parallel>], iteration_bounds = array<i64: 1>, scalar_prefetch = 0 : i64, scratch_operands = 0 : i64, tpu.core_type = #tpu.core_type<tc>, window_params = [{transform_indices = @transform_0, window_bounds = array<i64: 16, 784>}, {pipeline_mode = #tpu.pipeline_mode<synchronous>, transform_indices = @transform_1, window_bounds = array<i64: 784, 256>}, {pipeline_mode = #tpu.pipeline_mode<synchronous>, transform_indices = @transform_2, window_bounds = array<i64: 1, 256>}, {pipeline_mode = #tpu.pipeline_mode<synchronous>, transform_indices = @transform_3, window_bounds = array<i64: 256, 128>}, {pipeline_mode = #tpu.pipeline_mode<synchronous>, transform_indices = @transform_4, window_bounds = array<i64: 1, 128>}, {pipeline_mode = #tpu.pipeline_mode<synchronous>, transform_indices = @transform_5, window_bounds = array<i64: 128, 128>}, {pipeline_mode = #tpu.pipeline_mode<synchronous>, transform_indices = @transform_6, window_bounds = array<i64: 1, 128>}, {transform_indices = @transform_7, window_bounds = array<i64: 16, 128>}]} {
    %c0 = arith.constant 0 : index
    %c0_0 = arith.constant 0 : index
    %0 = vector.load %arg1[%c0, %c0_0] : memref<16x784xf32, #tpu.memory_space<vmem>>, vector<16x784xf32>
    %1 = arith.truncf %0 : vector<16x784xf32> to vector<16x784xbf16>
    %c0_1 = arith.constant 0 : index
    %c0_2 = arith.constant 0 : index
    %2 = vector.load %arg2[%c0_1, %c0_2] : memref<784x256xbf16, #tpu.memory_space<vmem>>, vector<784x256xbf16>
    %cst = arith.constant dense<0.000000e+00> : vector<16x256xf32>
    %3 = tpu.matmul %1, %2, %cst {dimension_numbers = #tpu.dot_dimension_numbers<[1], [0], [0], [1], [0, 0, 1, 1], [], []>} : vector<16x784xbf16>, vector<784x256xbf16>, vector<16x256xf32> -> vector<16x256xf32>
    %c0_3 = arith.constant 0 : index
    %c0_4 = arith.constant 0 : index
    %4 = vector.load %arg3[%c0_3, %c0_4] : memref<1x256xf32, #tpu.memory_space<vmem>>, vector<1x256xf32>
    %5 = vector.broadcast %4 : vector<1x256xf32> to vector<16x256xf32>
    %6 = arith.addf %3, %5 : vector<16x256xf32>
    %cst_5 = arith.constant 0.000000e+00 : f32
    %7 = vector.broadcast %cst_5 : f32 to vector<16x256xf32>
    %8 = arith.maximumf %6, %7 : vector<16x256xf32>
    %9 = arith.truncf %8 : vector<16x256xf32> to vector<16x256xbf16>
    %c0_6 = arith.constant 0 : index
    %c0_7 = arith.constant 0 : index
    %10 = vector.load %arg4[%c0_6, %c0_7] : memref<256x128xbf16, #tpu.memory_space<vmem>>, vector<256x128xbf16>
    %cst_8 = arith.constant dense<0.000000e+00> : vector<16x128xf32>
    %11 = tpu.matmul %9, %10, %cst_8 {dimension_numbers = #tpu.dot_dimension_numbers<[1], [0], [0], [1], [0, 0, 1, 1], [], []>} : vector<16x256xbf16>, vector<256x128xbf16>, vector<16x128xf32> -> vector<16x128xf32>
    %c0_9 = arith.constant 0 : index
    %c0_10 = arith.constant 0 : index
    %12 = vector.load %arg5[%c0_9, %c0_10] : memref<1x128xf32, #tpu.memory_space<vmem>>, vector<1x128xf32>
    %13 = vector.broadcast %12 : vector<1x128xf32> to vector<16x128xf32>
    %14 = arith.addf %11, %13 : vector<16x128xf32>
    %cst_11 = arith.constant 0.000000e+00 : f32
    %15 = vector.broadcast %cst_11 : f32 to vector<16x128xf32>
    %16 = arith.maximumf %14, %15 : vector<16x128xf32>
    %17 = arith.truncf %16 : vector<16x128xf32> to vector<16x128xbf16>
    %c0_12 = arith.constant 0 : index
    %c0_13 = arith.constant 0 : index
    %18 = vector.load %arg6[%c0_12, %c0_13] : memref<128x128xbf16, #tpu.memory_space<vmem>>, vector<128x128xbf16>
    %cst_14 = arith.constant dense<0.000000e+00> : vector<16x128xf32>
    %19 = tpu.matmul %17, %18, %cst_14 {dimension_numbers = #tpu.dot_dimension_numbers<[1], [0], [0], [1], [0, 0, 1, 1], [], []>} : vector<16x128xbf16>, vector<128x128xbf16>, vector<16x128xf32> -> vector<16x128xf32>
    %c0_15 = arith.constant 0 : index
    %c0_16 = arith.constant 0 : index
    %20 = vector.load %arg7[%c0_15, %c0_16] : memref<1x128xf32, #tpu.memory_space<vmem>>, vector<1x128xf32>
    %21 = vector.broadcast %20 : vector<1x128xf32> to vector<16x128xf32>
    %22 = arith.addf %19, %21 : vector<16x128xf32>
    %cst_17 = arith.constant dense<0xFF800000> : vector<16xf32>
    %23 = vector.multi_reduction <maximumf>, %22, %cst_17 [1] : vector<16x128xf32> to vector<16xf32>
    %24 = vector.shape_cast %23 : vector<16xf32> to vector<16x1xf32>
    %25 = vector.broadcast %24 : vector<16x1xf32> to vector<16x128xf32>
    %26 = arith.subf %22, %25 : vector<16x128xf32>
    %27 = math.exp %26 : vector<16x128xf32>
    %cst_18 = arith.constant dense<0.000000e+00> : vector<16xf32>
    %28 = vector.multi_reduction <add>, %27, %cst_18 [1] : vector<16x128xf32> to vector<16xf32>
    %29 = vector.shape_cast %28 : vector<16xf32> to vector<16x1xf32>
    %30 = math.log %29 : vector<16x1xf32>
    %31 = vector.broadcast %30 : vector<16x1xf32> to vector<16x128xf32>
    %32 = arith.subf %26, %31 : vector<16x128xf32>
    %33 = arith.truncf %32 : vector<16x128xf32> to vector<16x128xbf16>
    %c0_19 = arith.constant 0 : index
    %c0_20 = arith.constant 0 : index
    %34 = vector.load %arg8[%c0_19, %c0_20] : memref<16x128xbf16, #tpu.memory_space<vmem>>, vector<16x128xbf16>
    tpu.vector_store %arg8[%c0_19, %c0_20], %33 {strides = array<i32>} : memref<16x128xbf16, #tpu.memory_space<vmem>>, vector<16x128xbf16>,
    return
  }
  func.func @transform_0(%arg0: i32) -> (i32, i32) {
    %c0_i32 = arith.constant 0 : i32
    %c0_i32_0 = arith.constant 0 : i32
    return %arg0, %c0_i32 : i32, i32
  }
  func.func @transform_1(%arg0: i32) -> (i32, i32) {
    %c0_i32 = arith.constant 0 : i32
    %c0_i32_0 = arith.constant 0 : i32
    %c0_i32_1 = arith.constant 0 : i32
    return %c0_i32, %c0_i32_0 : i32, i32
  }
  func.func @transform_2(%arg0: i32) -> (i32, i32) {
    %c0_i32 = arith.constant 0 : i32
    %c0_i32_0 = arith.constant 0 : i32
    %c0_i32_1 = arith.constant 0 : i32
    return %c0_i32, %c0_i32_0 : i32, i32
  }
  func.func @transform_3(%arg0: i32) -> (i32, i32) {
    %c0_i32 = arith.constant 0 : i32
    %c0_i32_0 = arith.constant 0 : i32
    %c0_i32_1 = arith.constant 0 : i32
    return %c0_i32, %c0_i32_0 : i32, i32
  }
  func.func @transform_4(%arg0: i32) -> (i32, i32) {
    %c0_i32 = arith.constant 0 : i32
    %c0_i32_0 = arith.constant 0 : i32
    %c0_i32_1 = arith.constant 0 : i32
    return %c0_i32, %c0_i32_0 : i32, i32
  }
  func.func @transform_5(%arg0: i32) -> (i32, i32) {
    %c0_i32 = arith.constant 0 : i32
    %c0_i32_0 = arith.constant 0 : i32
    %c0_i32_1 = arith.constant 0 : i32
    return %c0_i32, %c0_i32_0 : i32, i32
  }
  func.func @transform_6(%arg0: i32) -> (i32, i32) {
    %c0_i32 = arith.constant 0 : i32
    %c0_i32_0 = arith.constant 0 : i32
    %c0_i32_1 = arith.constant 0 : i32
    return %c0_i32, %c0_i32_0 : i32, i32
  }
  func.func @transform_7(%arg0: i32) -> (i32, i32) {
    %c0_i32 = arith.constant 0 : i32
    %c0_i32_0 = arith.constant 0 : i32
    return %arg0, %c0_i32 : i32, i32
  }
}

</mosaic_0001>

<llo_original>
// kernel: tpu_custom_call.1
$region0: #{tpu_custom_call.1}
  #allocation0 [shape = 'u32[]', space=smem, size = 0x4, offset = 0x4, fixed_abs, tag = 'smem constant byte address 0x4 - core index']
  #allocation1 [shape = 'u32[144,128]{1,0:T(1,128)}', space=vmem, size = 0x12000, scoped, tag = 'internal scratch']
  %s0 = inlined_call_operand.hbm [shape: f32[16,784], index: 0, kind: input, shape index: {}]
  %s1 = inlined_call_operand.hbm [shape: bf16[784,256], index: 1, kind: input, shape index: {}]
  %s2 = inlined_call_operand.vmem [shape: f32[1,256], index: 2, kind: input, shape index: {}]
  %s3 = inlined_call_operand.hbm [shape: bf16[256,128], index: 3, kind: input, shape index: {}]
  %s4 = inlined_call_operand.vmem [shape: f32[1,128], index: 4, kind: input, shape index: {}]
  %s5 = inlined_call_operand.hbm [shape: bf16[128,128], index: 5, kind: input, shape index: {}]
  %s6 = inlined_call_operand.vmem [shape: f32[1,128], index: 6, kind: input, shape index: {}]
  %s7 = inlined_call_operand.hbm [shape: bf16[16,128], index: 7, kind: output, shape index: {}]
  %s8 = sld [smem:[#allocation0]]
  $region54: #{tpu_custom_call.1} parent=0
    _
  %s10 = ssub.s32 1, %s8
  %s11 = scalar_select 0, %s10, %s8
  $region1: #{tpu_custom_call.1} parent=0
    #allocation2 [shape = 'u8[57344]{0}', space=vmem, size = 0xe000, scoped, tag = 'input window, operand 0, single buffered']
    #allocation3 [shape = 's32[1]{0}', space=sflag, size = 0x4, scoped, tag = 'scoped memory for tpu_custom_call.1']
    #allocation4 [shape = 's32[1]{0}', space=sflag, size = 0x4, scoped, tag = 'scoped memory for tpu_custom_call.1']
    #allocation5 [shape = 'u8[401408]{0}', space=vmem, size = 0x62000, scoped, tag = 'input window, operand 1, single buffered']
    #allocation6 [shape = 's32[1]{0}', space=sflag, size = 0x4, scoped, tag = 'scoped memory for tpu_custom_call.1']
    #allocation7 [shape = 'u8[65536]{0}', space=vmem, size = 0x10000, scoped, tag = 'input window, operand 3, single buffered']
    #allocation8 [shape = 'u8[32768]{0}', space=vmem, size = 0x8000, scoped, tag = 'input window, operand 5, single buffered']
    #allocation9 [shape = 's32[1]{0}', space=sflag, size = 0x4, scoped, tag = 'scoped memory for tpu_custom_call.1']
    #allocation10 [shape = 'u8[4096]{0}', space=vmem, size = 0x1000, scoped, tag = 'output window, operand 0, single buffered']
    %12 = vsyncpa [#allocation3], 0
    %13 = vsyncpa [#allocation6], 0
    %14 = vsyncpa [#allocation9], 0
    %15 = vsyncpa [#allocation4], 0
    // Predicated region
    $region2: #{tpu_custom_call.1} parent=1 // pred_check
      _
    $region3: #{tpu_custom_call.1} parent=1 // pred_check_branch
      %17 = sbr.rel (0) target = $region5
    $region4: #{tpu_custom_call.1} parent=1 // pred_region
      %s19 = ssub.s32 1792, 1792
      %20 = vsyncadd [#allocation3], %s19
      %s21 = sshll.u32 [#allocation2], 4
      %s22 = int_to_ptr.vmem [resolvable:$true] %s21
      %27 = dma.hbm_to_vmem [thread:$0]  %s0, 1792, %s22, [#allocation3], 896, 896, 56
    $region5: #{tpu_custom_call.1} parent=1 // pred_fallthru
      _
    // Predicated region
    $region6: #{tpu_custom_call.1} parent=1 // pred_check
      _
    $region7: #{tpu_custom_call.1} parent=1 // pred_check_branch
      %29 = sbr.rel (0) target = $region9
    $region8: #{tpu_custom_call.1} parent=1 // pred_region
      %s31 = ssub.s32 12544, 12544
      %32 = vsyncadd [#allocation6], %s31
      %s33 = sshll.u32 [#allocation5], 4
      %s34 = int_to_ptr.vmem [resolvable:$true] %s33
      %39 = dma.hbm_to_vmem [thread:$0]  %s1, 12544, %s34, [#allocation6], 128, 128, 8
    $region9: #{tpu_custom_call.1} parent=1 // pred_fallthru
      _
    // Predicated region
    $region10: #{tpu_custom_call.1} parent=1 // pred_check
      _
    $region11: #{tpu_custom_call.1} parent=1 // pred_check_branch
      %41 = sbr.rel (0) target = $region13
    $region12: #{tpu_custom_call.1} parent=1 // pred_region
      _
    $region13: #{tpu_custom_call.1} parent=1 // pred_fallthru
      _
    // Predicated region
    $region14: #{tpu_custom_call.1} parent=1 // pred_check
      _
    $region15: #{tpu_custom_call.1} parent=1 // pred_check_branch
      %43 = sbr.rel (0) target = $region17
    $region16: #{tpu_custom_call.1} parent=1 // pred_region
      %s45 = ssub.s32 2048, 2048
      %46 = vsyncadd [#allocation6], %s45
      %s47 = sshll.u32 [#allocation7], 4
      %s48 = int_to_ptr.vmem [resolvable:$true] %s47
      %53 = dma.hbm_to_vmem [thread:$0]  %s3, 2048, %s48, [#allocation6], 64, 64, 4
    $region17: #{tpu_custom_call.1} parent=1 // pred_fallthru
      _
    // Predicated region
    $region18: #{tpu_custom_call.1} parent=1 // pred_check
      _
    $region19: #{tpu_custom_call.1} parent=1 // pred_check_branch
      %55 = sbr.rel (0) target = $region21
    $region20: #{tpu_custom_call.1} parent=1 // pred_region
      _
    $region21: #{tpu_custom_call.1} parent=1 // pred_fallthru
      _
    // Predicated region
    $region22: #{tpu_custom_call.1} parent=1 // pred_check
      _
    $region23: #{tpu_custom_call.1} parent=1 // pred_check_branch
      %57 = sbr.rel (0) target = $region25
    $region24: #{tpu_custom_call.1} parent=1 // pred_region
      %s59 = ssub.s32 1024, 1024
      %60 = vsyncadd [#allocation9], %s59
      %s61 = sshll.u32 [#allocation8], 4
      %s62 = int_to_ptr.vmem [resolvable:$true] %s61
      %67 = dma.hbm_to_vmem [thread:$0]  %s5, 1024, %s62, [#allocation9], 64, 64, 4
    $region25: #{tpu_custom_call.1} parent=1 // pred_fallthru
      _
    // Predicated region
    $region26: #{tpu_custom_call.1} parent=1 // pred_check
      _
    $region27: #{tpu_custom_call.1} parent=1 // pred_check_branch
      %69 = sbr.rel (0) target = $region29
    $region28: #{tpu_custom_call.1} parent=1 // pred_region
      _
    $region29: #{tpu_custom_call.1} parent=1 // pred_fallthru
      _
    // Predicated region
    $region30: #{tpu_custom_call.1} parent=1 // pred_check
      _
    $region31: #{tpu_custom_call.1} parent=1 // pred_check_branch
      %71 = sbr.rel (0) target = $region33
    $region32: #{tpu_custom_call.1} parent=1 // pred_region
      %72 = dma.done [#allocation3], 1792
    $region33: #{tpu_custom_call.1} parent=1 // pred_fallthru
      _
    // Predicated region
    $region34: #{tpu_custom_call.1} parent=1 // pred_check
      _
    $region35: #{tpu_custom_call.1} parent=1 // pred_check_branch
      %74 = sbr.rel (0) target = $region37
    $region36: #{tpu_custom_call.1} parent=1 // pred_region
      %75 = dma.done [#allocation6], 12544
    $region37: #{tpu_custom_call.1} parent=1 // pred_fallthru
      _
    // Predicated region
    $region38: #{tpu_custom_call.1} parent=1 // pred_check
      _
    $region39: #{tpu_custom_call.1} parent=1 // pred_check_branch
      %77 = sbr.rel (0) target = $region41
    $region40: #{tpu_custom_call.1} parent=1 // pred_region
      %78 = dma.done [#allocation6], 2048
    $region41: #{tpu_custom_call.1} parent=1 // pred_fallthru
      _
    // Predicated region
    $region42: #{tpu_custom_call.1} parent=1 // pred_check
      _
    $region43: #{tpu_custom_call.1} parent=1 // pred_check_branch
      %80 = sbr.rel (0) target = $region45
    $region44: #{tpu_custom_call.1} parent=1 // pred_region
      %81 = dma.done [#allocation9], 1024
    $region45: #{tpu_custom_call.1} parent=1 // pred_fallthru
      _
    %v83 = vld [vmem:[#allocation2] sm:$0xff]
    %v84 = vld [vmem:[#allocation2 + $0x8] sm:$0xff]
    %v85 = vld [vmem:[#allocation2 + $0x10] sm:$0xff]
    %v86 = vld [vmem:[#allocation2 + $0x18] sm:$0xff]
    %v87 = vld [vmem:[#allocation2 + $0x20] sm:$0xff]
    %v88 = vld [vmem:[#allocation2 + $0x28] sm:$0xff]
    %v89 = vld [vmem:[#allocation2 + $0x30] sm:$0xff]
    %v90 = vld [vmem:[#allocation2 + $0x38] sm:$0xff]
    %v91 = vld [vmem:[#allocation2 + $0x40] sm:$0xff]
    %v92 = vld [vmem:[#allocation2 + $0x48] sm:$0xff]
    %v93 = vld [vmem:[#allocation2 + $0x50] sm:$0xff]
    %v94 = vld [vmem:[#allocation2 + $0x58] sm:$0xff]
    %v95 = vld [vmem:[#allocation2 + $0x60] sm:$0xff]
    %v96 = vld [vmem:[#allocation2 + $0x68] sm:$0xff]
    %v97 = vpack.c.bf16 %v90, %v83
    %v98 = vpack.c.bf16 %v91, %v84
    %v99 = vpack.c.bf16 %v92, %v85
    %v100 = vpack.c.bf16 %v93, %v86
    %v101 = vpack.c.bf16 %v94, %v87
    %v102 = vpack.c.bf16 %v95, %v88
    %v103 = vpack.c.bf16 %v96, %v89
    %v104 = vld [vmem:[#allocation5] sm:$0xff]
    %v105 = vld [vmem:[#allocation5 + $0x8] sm:$0xff]
    %v106 = vld [vmem:[#allocation5 + $0x10] sm:$0xff]
    %v107 = vld [vmem:[#allocation5 + $0x18] sm:$0xff]
    %v108 = vld [vmem:[#allocation5 + $0x20] sm:$0xff]
    %v109 = vld [vmem:[#allocation5 + $0x28] sm:$0xff]
    %v110 = vld [vmem:[#allocation5 + $0x30] sm:$0xff]
    %v111 = vld [vmem:[#allocation5 + $0x38] sm:$0xff]
    %v112 = vld [vmem:[#allocation5 + $0x40] sm:$0xff]
    %v113 = vld [vmem:[#allocation5 + $0x48] sm:$0xff]
    %v114 = vld [vmem:[#allocation5 + $0x50] sm:$0xff]
    %v115 = vld [vmem:[#allocation5 + $0x58] sm:$0xff]
    %v116 = vld [vmem:[#allocation5 + $0x60] sm:$0xff]
    %v117 = vld [vmem:[#allocation5 + $0x68] sm:$0xff]
    %v118 = vld [vmem:[#allocation5 + $0x70] sm:$0xff]
    %v119 = vld [vmem:[#allocation5 + $0x78] sm:$0xff]
    %v120 = vld [vmem:[#allocation5 + $0x80] sm:$0xff]
    %v121 = vld [vmem:[#allocation5 + $0x88] sm:$0xff]
    %v122 = vld [vmem:[#allocation5 + $0x90] sm:$0xff]
    %v123 = vld [vmem:[#allocation5 + $0x98] sm:$0xff]
    %v124 = vld [vmem:[#allocation5 + $0xa0] sm:$0xff]
    %v125 = vld [vmem:[#allocation5 + $0xa8] sm:$0xff]
    %v126 = vld [vmem:[#allocation5 + $0xb0] sm:$0xff]
    %v127 = vld [vmem:[#allocation5 + $0xb8] sm:$0xff]
    %v128 = vld [vmem:[#allocation5 + $0xc0] sm:$0xff]
    %v129 = vld [vmem:[#allocation5 + $0xc8] sm:$0xff]
    %v130 = vld [vmem:[#allocation5 + $0xd0] sm:$0xff]
    %v131 = vld [vmem:[#allocation5 + $0xd8] sm:$0xff]
    %v132 = vld [vmem:[#allocation5 + $0xe0] sm:$0xff]
    %v133 = vld [vmem:[#allocation5 + $0xe8] sm:$0xff]
    %v134 = vld [vmem:[#allocation5 + $0xf0] sm:$0xff]
    %v135 = vld [vmem:[#allocation5 + $0xf8] sm:$0xff]
    %v136 = vld [vmem:[#allocation5 + $0x100] sm:$0xff]
    %v137 = vld [vmem:[#allocation5 + $0x108] sm:$0xff]
    %v138 = vld [vmem:[#allocation5 + $0x110] sm:$0xff]
    %v139 = vld [vmem:[#allocation5 + $0x118] sm:$0xff]
    %v140 = vld [vmem:[#allocation5 + $0x120] sm:$0xff]
    %v141 = vld [vmem:[#allocation5 + $0x128] sm:$0xff]
    %v142 = vld [vmem:[#allocation5 + $0x130] sm:$0xff]
    %v143 = vld [vmem:[#allocation5 + $0x138] sm:$0xff]
    %v144 = vld [vmem:[#allocation5 + $0x140] sm:$0xff]
    %v145 = vld [vmem:[#allocation5 + $0x148] sm:$0xff]
    %v146 = vld [vmem:[#allocation5 + $0x150] sm:$0xff]
    %v147 = vld [vmem:[#allocation5 + $0x158] sm:$0xff]
    %v148 = vld [vmem:[#allocation5 + $0x160] sm:$0xff]
    %v149 = vld [vmem:[#allocation5 + $0x168] sm:$0xff]
    %v150 = vld [vmem:[#allocation5 + $0x170] sm:$0xff]
    %v151 = vld [vmem:[#allocation5 + $0x178] sm:$0xff]
    %v152 = vld [vmem:[#allocation5 + $0x180] sm:$0xff]
    %v153 = vld [vmem:[#allocation5 + $0x188] sm:$0xff]
    %v154 = vld [vmem:[#allocation5 + $0x190] sm:$0xff]
    %v155 = vld [vmem:[#allocation5 + $0x198] sm:$0xff]
    %v156 = vld [vmem:[#allocation5 + $0x1a0] sm:$0xff]
    %v157 = vld [vmem:[#allocation5 + $0x1a8] sm:$0xff]
    %v158 = vld [vmem:[#allocation5 + $0x1b0] sm:$0xff]
    %v159 = vld [vmem:[#allocation5 + $0x1b8] sm:$0xff]
    %v160 = vld [vmem:[#allocation5 + $0x1c0] sm:$0xff]
    %v161 = vld [vmem:[#allocation5 + $0x1c8] sm:$0xff]
    %v162 = vld [vmem:[#allocation5 + $0x1d0] sm:$0xff]
    %v163 = vld [vmem:[#allocation5 + $0x1d8] sm:$0xff]
    %v164 = vld [vmem:[#allocation5 + $0x1e0] sm:$0xff]
    %v165 = vld [vmem:[#allocation5 + $0x1e8] sm:$0xff]
    %v166 = vld [vmem:[#allocation5 + $0x1f0] sm:$0xff]
    %v167 = vld [vmem:[#allocation5 + $0x1f8] sm:$0xff]
    %v168 = vld [vmem:[#allocation5 + $0x200] sm:$0xff]
    %v169 = vld [vmem:[#allocation5 + $0x208] sm:$0xff]
    %v170 = vld [vmem:[#allocation5 + $0x210] sm:$0xff]
    %v171 = vld [vmem:[#allocation5 + $0x218] sm:$0xff]
    %v172 = vld [vmem:[#allocation5 + $0x220] sm:$0xff]
    %v173 = vld [vmem:[#allocation5 + $0x228] sm:$0xff]
    %v174 = vld [vmem:[#allocation5 + $0x230] sm:$0xff]
    %v175 = vld [vmem:[#allocation5 + $0x238] sm:$0xff]
    %v176 = vld [vmem:[#allocation5 + $0x240] sm:$0xff]
    %v177 = vld [vmem:[#allocation5 + $0x248] sm:$0xff]
    %v178 = vld [vmem:[#allocation5 + $0x250] sm:$0xff]
    %v179 = vld [vmem:[#allocation5 + $0x258] sm:$0xff]
    %v180 = vld [vmem:[#allocation5 + $0x260] sm:$0xff]
    %v181 = vld [vmem:[#allocation5 + $0x268] sm:$0xff]
    %v182 = vld [vmem:[#allocation5 + $0x270] sm:$0xff]
    %v183 = vld [vmem:[#allocation5 + $0x278] sm:$0xff]
    %v184 = vld [vmem:[#allocation5 + $0x280] sm:$0xff]
    %v185 = vld [vmem:[#allocation5 + $0x288] sm:$0xff]
    %v186 = vld [vmem:[#allocation5 + $0x290] sm:$0xff]
    %v187 = vld [vmem:[#allocation5 + $0x298] sm:$0xff]
    %v188 = vld [vmem:[#allocation5 + $0x2a0] sm:$0xff]
    %v189 = vld [vmem:[#allocation5 + $0x2a8] sm:$0xff]
    %v190 = vld [vmem:[#allocation5 + $0x2b0] sm:$0xff]
    %v191 = vld [vmem:[#allocation5 + $0x2b8] sm:$0xff]
    %v192 = vld [vmem:[#allocation5 + $0x2c0] sm:$0xff]
    %v193 = vld [vmem:[#allocation5 + $0x2c8] sm:$0xff]
    %v194 = vld [vmem:[#allocation5 + $0x2d0] sm:$0xff]
    %v195 = vld [vmem:[#allocation5 + $0x2d8] sm:$0xff]
    %v196 = vld [vmem:[#allocation5 + $0x2e0] sm:$0xff]
    %v197 = vld [vmem:[#allocation5 + $0x2e8] sm:$0xff]
    %v198 = vld [vmem:[#allocation5 + $0x2f0] sm:$0xff]
    %v199 = vld [vmem:[#allocation5 + $0x2f8] sm:$0xff]
    %v200 = vld [vmem:[#allocation5 + $0x300] sm:$0xff]
    %v201 = vld [vmem:[#allocation5 + $0x308] sm:$0xff]
    %v202 = vld [vmem:[%s2] sm:$0x3]
    %v204 = vlaneseq
    %v205 = vshrl.u32 %v204, 7
    %v206 = vsub.s32 0, %v205
    %v207 = vrot.slane %v202, %v206
    %v208 = vlaneseq
    %v209 = vshrl.u32 %v208, 7
    %v210 = vsub.s32 1, %v209
    %v211 = vrot.slane %v202, %v210
    %v312 = vunpack.c.l.b16 %v104
    %v313 = vunpack.c.h.b16 %v104
    %v314 = vunpack.c.l.b16 %v105
    %v315 = vunpack.c.h.b16 %v105
    %v316 = vunpack.c.l.b16 %v106
    %v317 = vunpack.c.h.b16 %v106
    %v318 = vunpack.c.l.b16 %v107
    %v319 = vunpack.c.h.b16 %v107
    %v320 = vunpack.c.l.b16 %v108
    %v321 = vunpack.c.h.b16 %v108
    %v322 = vunpack.c.l.b16 %v109
    %v323 = vunpack.c.h.b16 %v109
    %v324 = vunpack.c.l.b16 %v110
    %v325 = vunpack.c.h.b16 %v110
    %v326 = vunpack.c.l.b16 %v111
    %v327 = vunpack.c.h.b16 %v111
    %v328 = vunpack.c.l.b16 %v112
    %v329 = vunpack.c.h.b16 %v112
    %v330 = vunpack.c.l.b16 %v113
    %v331 = vunpack.c.h.b16 %v113
    %v332 = vunpack.c.l.b16 %v114
    %v333 = vunpack.c.h.b16 %v114
    %v334 = vunpack.c.l.b16 %v115
    %v335 = vunpack.c.h.b16 %v115
    %v336 = vunpack.c.l.b16 %v116
    %v337 = vunpack.c.h.b16 %v116
    %v338 = vunpack.c.l.b16 %v117
    %v339 = vunpack.c.h.b16 %v117
    %v340 = vunpack.c.l.b16 %v118
    %v341 = vunpack.c.h.b16 %v118
    %v342 = vunpack.c.l.b16 %v119
    %v343 = vunpack.c.h.b16 %v119
    %v344 = vunpack.c.l.b16 %v120
    %v345 = vunpack.c.h.b16 %v120
    %v346 = vunpack.c.l.b16 %v121
    %v347 = vunpack.c.h.b16 %v121
    %v348 = vunpack.c.l.b16 %v122
    %v349 = vunpack.c.h.b16 %v122
    %v350 = vunpack.c.l.b16 %v123
    %v351 = vunpack.c.h.b16 %v123
    %v352 = vunpack.c.l.b16 %v124
    %v353 = vunpack.c.h.b16 %v124
    %v354 = vunpack.c.l.b16 %v125
    %v355 = vunpack.c.h.b16 %v125
    %v356 = vunpack.c.l.b16 %v126
    %v357 = vunpack.c.h.b16 %v126
    %v358 = vunpack.c.l.b16 %v127
    %v359 = vunpack.c.h.b16 %v127
    %v360 = vunpack.c.l.b16 %v128
    %v361 = vunpack.c.h.b16 %v128
    %v362 = vunpack.c.l.b16 %v129
    %v363 = vunpack.c.h.b16 %v129
    %v364 = vunpack.c.l.b16 %v130
    %v365 = vunpack.c.h.b16 %v130
    %v366 = vunpack.c.l.b16 %v131
    %v367 = vunpack.c.h.b16 %v131
    %v368 = vunpack.c.l.b16 %v132
    %v369 = vunpack.c.h.b16 %v132
    %v370 = vunpack.c.l.b16 %v133
    %v371 = vunpack.c.h.b16 %v133
    %v372 = vunpack.c.l.b16 %v134
    %v373 = vunpack.c.h.b16 %v134
    %v374 = vunpack.c.l.b16 %v135
    %v375 = vunpack.c.h.b16 %v135
    %v376 = vunpack.c.l.b16 %v136
    %v377 = vunpack.c.h.b16 %v136
    %v378 = vunpack.c.l.b16 %v137
    %v379 = vunpack.c.h.b16 %v137
    %v380 = vunpack.c.l.b16 %v138
    %v381 = vunpack.c.h.b16 %v138
    %v382 = vunpack.c.l.b16 %v139
    %v383 = vunpack.c.h.b16 %v139
    %v384 = vunpack.c.l.b16 %v140
    %v385 = vunpack.c.h.b16 %v140
    %v386 = vunpack.c.l.b16 %v141
    %v387 = vunpack.c.h.b16 %v141
    %v388 = vunpack.c.l.b16 %v142
    %v389 = vunpack.c.h.b16 %v142
    %v390 = vunpack.c.l.b16 %v143
    %v391 = vunpack.c.h.b16 %v143
    %v392 = vunpack.c.l.b16 %v144
    %v393 = vunpack.c.h.b16 %v144
    %v394 = vunpack.c.l.b16 %v145
    %v395 = vunpack.c.h.b16 %v145
    %v396 = vunpack.c.l.b16 %v146
    %v397 = vunpack.c.h.b16 %v146
    %v398 = vunpack.c.l.b16 %v147
    %v399 = vunpack.c.h.b16 %v147
    %v400 = vunpack.c.l.b16 %v148
    %v401 = vunpack.c.h.b16 %v148
    %v402 = vunpack.c.l.b16 %v149
    %v403 = vunpack.c.h.b16 %v149
    %v404 = vunpack.c.l.b16 %v150
    %v405 = vunpack.c.h.b16 %v150
    %v406 = vunpack.c.l.b16 %v151
    %v407 = vunpack.c.h.b16 %v151
    %v408 = vunpack.c.l.b16 %v152
    %v409 = vunpack.c.h.b16 %v152
    %v410 = vunpack.c.l.b16 %v153
    %v411 = vunpack.c.h.b16 %v153
    %v412 = vunpack.c.l.b16 %v154
    %v413 = vunpack.c.h.b16 %v154
    %v414 = vunpack.c.l.b16 %v155
    %v415 = vunpack.c.h.b16 %v155
    %v416 = vunpack.c.l.b16 %v156
    %v417 = vunpack.c.h.b16 %v156
    %v418 = vunpack.c.l.b16 %v157
    %v419 = vunpack.c.h.b16 %v157
    %v420 = vunpack.c.l.b16 %v158
    %v421 = vunpack.c.h.b16 %v158
    %v422 = vunpack.c.l.b16 %v159
    %v423 = vunpack.c.h.b16 %v159
    %v424 = vunpack.c.l.b16 %v160
    %v425 = vunpack.c.h.b16 %v160
    %v426 = vunpack.c.l.b16 %v161
    %v427 = vunpack.c.h.b16 %v161
    %v428 = vunpack.c.l.b16 %v162
    %v429 = vunpack.c.h.b16 %v162
    %v430 = vunpack.c.l.b16 %v163
    %v431 = vunpack.c.h.b16 %v163
    %v432 = vunpack.c.l.b16 %v164
    %v433 = vunpack.c.h.b16 %v164
    %v434 = vunpack.c.l.b16 %v165
    %v435 = vunpack.c.h.b16 %v165
    %v436 = vunpack.c.l.b16 %v166
    %v437 = vunpack.c.h.b16 %v166
    %v438 = vunpack.c.l.b16 %v167
    %v439 = vunpack.c.h.b16 %v167
    %v440 = vunpack.c.l.b16 %v168
    %v441 = vunpack.c.h.b16 %v168
    %v442 = vunpack.c.l.b16 %v169
    %v443 = vunpack.c.h.b16 %v169
    %v444 = vunpack.c.l.b16 %v170
    %v445 = vunpack.c.h.b16 %v170
    %v446 = vunpack.c.l.b16 %v171
    %v447 = vunpack.c.h.b16 %v171
    %v448 = vunpack.c.l.b16 %v172
    %v449 = vunpack.c.h.b16 %v172
    %v450 = vunpack.c.l.b16 %v173
    %v451 = vunpack.c.h.b16 %v173
    %v452 = vunpack.c.l.b16 %v174
    %v453 = vunpack.c.h.b16 %v174
    %v454 = vunpack.c.l.b16 %v175
    %v455 = vunpack.c.h.b16 %v175
    %v456 = vunpack.c.l.b16 %v176
    %v457 = vunpack.c.h.b16 %v176
    %v458 = vunpack.c.l.b16 %v177
    %v459 = vunpack.c.h.b16 %v177
    %v460 = vunpack.c.l.b16 %v178
    %v461 = vunpack.c.h.b16 %v178
    %v462 = vunpack.c.l.b16 %v179
    %v463 = vunpack.c.h.b16 %v179
    %v464 = vunpack.c.l.b16 %v180
    %v465 = vunpack.c.h.b16 %v180
    %v466 = vunpack.c.l.b16 %v181
    %v467 = vunpack.c.h.b16 %v181
    %v468 = vunpack.c.l.b16 %v182
    %v469 = vunpack.c.h.b16 %v182
    %v470 = vunpack.c.l.b16 %v183
    %v471 = vunpack.c.h.b16 %v183
    %v472 = vunpack.c.l.b16 %v184
    %v473 = vunpack.c.h.b16 %v184
    %v474 = vunpack.c.l.b16 %v185
    %v475 = vunpack.c.h.b16 %v185
    %v476 = vunpack.c.l.b16 %v186
    %v477 = vunpack.c.h.b16 %v186
    %v478 = vunpack.c.l.b16 %v187
    %v479 = vunpack.c.h.b16 %v187
    %v480 = vunpack.c.l.b16 %v188
    %v481 = vunpack.c.h.b16 %v188
    %v482 = vunpack.c.l.b16 %v189
    %v483 = vunpack.c.h.b16 %v189
    %v484 = vunpack.c.l.b16 %v190
    %v485 = vunpack.c.h.b16 %v190
    %v486 = vunpack.c.l.b16 %v191
    %v487 = vunpack.c.h.b16 %v191
    %v488 = vunpack.c.l.b16 %v192
    %v489 = vunpack.c.h.b16 %v192
    %v490 = vunpack.c.l.b16 %v193
    %v491 = vunpack.c.h.b16 %v193
    %v492 = vunpack.c.l.b16 %v194
    %v493 = vunpack.c.h.b16 %v194
    %v494 = vunpack.c.l.b16 %v195
    %v495 = vunpack.c.h.b16 %v195
    %v496 = vunpack.c.l.b16 %v196
    %v497 = vunpack.c.h.b16 %v196
    %v498 = vunpack.c.l.b16 %v197
    %v499 = vunpack.c.h.b16 %v197
    %v500 = vunpack.c.l.b16 %v198
    %v501 = vunpack.c.h.b16 %v198
    %v502 = vunpack.c.l.b16 %v199
    %v503 = vunpack.c.h.b16 %v199
    %v504 = vunpack.c.l.b16 %v200
    %v505 = vunpack.c.h.b16 %v200
    %v506 = vunpack.c.l.b16 %v201
    %v507 = vunpack.c.h.b16 %v201
    %v508 = vpack.c.b16 %v314, %v312
    %v509 = vpack.c.b16 %v315, %v313
    %v510 = vpack.c.b16 %v318, %v316
    %v511 = vpack.c.b16 %v319, %v317
    %v512 = vpack.c.b16 %v322, %v320
    %v513 = vpack.c.b16 %v323, %v321
    %v514 = vpack.c.b16 %v326, %v324
    %v515 = vpack.c.b16 %v327, %v325
    %v516 = vpack.c.b16 %v330, %v328
    %v517 = vpack.c.b16 %v331, %v329
    %v518 = vpack.c.b16 %v334, %v332
    %v519 = vpack.c.b16 %v335, %v333
    %v520 = vpack.c.b16 %v338, %v336
    %v521 = vpack.c.b16 %v339, %v337
    %v522 = vpack.c.b16 %v342, %v340
    %v523 = vpack.c.b16 %v343, %v341
    %v524 = vpack.c.b16 %v346, %v344
    %v525 = vpack.c.b16 %v347, %v345
    %v526 = vpack.c.b16 %v350, %v348
    %v527 = vpack.c.b16 %v351, %v349
    %v528 = vpack.c.b16 %v354, %v352
    %v529 = vpack.c.b16 %v355, %v353
    %v530 = vpack.c.b16 %v358, %v356
    %v531 = vpack.c.b16 %v359, %v357
    %v532 = vpack.c.b16 %v362, %v360
    %v533 = vpack.c.b16 %v363, %v361
    %v534 = vpack.c.b16 %v366, %v364
    %v535 = vpack.c.b16 %v367, %v365
    %v536 = vpack.c.b16 %v370, %v368
    %v537 = vpack.c.b16 %v371, %v369
    %v538 = vpack.c.b16 %v374, %v372
    %v539 = vpack.c.b16 %v375, %v373
    %v540 = vpack.c.b16 %v378, %v376
    %v541 = vpack.c.b16 %v379, %v377
    %v542 = vpack.c.b16 %v382, %v380
    %v543 = vpack.c.b16 %v383, %v381
    %v544 = vpack.c.b16 %v386, %v384
    %v545 = vpack.c.b16 %v387, %v385
    %v546 = vpack.c.b16 %v390, %v388
    %v547 = vpack.c.b16 %v391, %v389
    %v548 = vpack.c.b16 %v394, %v392
    %v549 = vpack.c.b16 %v395, %v393
    %v550 = vpack.c.b16 %v398, %v396
    %v551 = vpack.c.b16 %v399, %v397
    %v552 = vpack.c.b16 %v402, %v400
    %v553 = vpack.c.b16 %v403, %v401
    %v554 = vpack.c.b16 %v406, %v404
    %v555 = vpack.c.b16 %v407, %v405
    %v556 = vpack.c.b16 %v410, %v408
    %v557 = vpack.c.b16 %v411, %v409
    %v558 = vpack.c.b16 %v414, %v412
    %v559 = vpack.c.b16 %v415, %v413
    %v560 = vpack.c.b16 %v418, %v416
    %v561 = vpack.c.b16 %v419, %v417
    %v562 = vpack.c.b16 %v422, %v420
    %v563 = vpack.c.b16 %v423, %v421
    %v564 = vpack.c.b16 %v426, %v424
    %v565 = vpack.c.b16 %v427, %v425
    %v566 = vpack.c.b16 %v430, %v428
    %v567 = vpack.c.b16 %v431, %v429
    %v568 = vpack.c.b16 %v434, %v432
    %v569 = vpack.c.b16 %v435, %v433
    %v570 = vpack.c.b16 %v438, %v436
    %v571 = vpack.c.b16 %v439, %v437
    %v572 = vpack.c.b16 %v442, %v440
    %v573 = vpack.c.b16 %v443, %v441
    %v574 = vpack.c.b16 %v446, %v444
    %v575 = vpack.c.b16 %v447, %v445
    %v576 = vpack.c.b16 %v450, %v448
    %v577 = vpack.c.b16 %v451, %v449
    %v578 = vpack.c.b16 %v454, %v452
    %v579 = vpack.c.b16 %v455, %v453
    %v580 = vpack.c.b16 %v458, %v456
    %v581 = vpack.c.b16 %v459, %v457
    %v582 = vpack.c.b16 %v462, %v460
    %v583 = vpack.c.b16 %v463, %v461
    %v584 = vpack.c.b16 %v466, %v464
    %v585 = vpack.c.b16 %v467, %v465
    %v586 = vpack.c.b16 %v470, %v468
    %v587 = vpack.c.b16 %v471, %v469
    %v588 = vpack.c.b16 %v474, %v472
    %v589 = vpack.c.b16 %v475, %v473
    %v590 = vpack.c.b16 %v478, %v476
    %v591 = vpack.c.b16 %v479, %v477
    %v592 = vpack.c.b16 %v482, %v480
    %v593 = vpack.c.b16 %v483, %v481
    %v594 = vpack.c.b16 %v486, %v484
    %v595 = vpack.c.b16 %v487, %v485
    %v596 = vpack.c.b16 %v490, %v488
    %v597 = vpack.c.b16 %v491, %v489
    %v598 = vpack.c.b16 %v494, %v492
    %v599 = vpack.c.b16 %v495, %v493
    %v600 = vpack.c.b16 %v498, %v496
    %v601 = vpack.c.b16 %v499, %v497
    %v602 = vpack.c.b16 %v502, %v500
    %v603 = vpack.c.b16 %v503, %v501
    %v604 = vpack.c.b16 %v506, %v504
    %v605 = vpack.c.b16 %v507, %v505
    %vm704 = vcmask 130048
    %v706 = vsel %vm704, %v103, 0
    %708 = vmatprep.subr.bf16.mxu0 %v509
    %709 = vmatpush1.bf16.msra.mxu0 %v508
    %710 = vmatprep.subr.bf16.mxu0 %v511
    %711 = vmatpush1.bf16.msra.mxu0 %v510
    %712 = vmatprep.subr.bf16.mxu0 %v513
    %713 = vmatpush1.bf16.msra.mxu0 %v512
    %714 = vmatprep.subr.bf16.mxu0 %v515
    %715 = vmatpush1.bf16.msra.mxu0 %v514
    %716 = vmatprep.subr.bf16.mxu0 %v517
    %717 = vmatpush1.bf16.msra.mxu0 %v516
    %718 = vmatprep.subr.bf16.mxu0 %v519
    %719 = vmatpush1.bf16.msra.mxu0 %v518
    %720 = vmatprep.subr.bf16.mxu0 %v521
    %721 = vmatpush1.bf16.msra.mxu0 %v520
    %722 = vmatprep.subr.bf16.mxu0 %v523
    %723 = vmatpush1.bf16.msra.mxu0 %v522
    %724 = vmatprep.subr.bf16.mxu0 %v525
    %725 = vmatpush1.bf16.msra.mxu0 %v524
    %726 = vmatprep.subr.bf16.mxu0 %v527
    %727 = vmatpush1.bf16.msra.mxu0 %v526
    %728 = vmatprep.subr.bf16.mxu0 %v529
    %729 = vmatpush1.bf16.msra.mxu0 %v528
    %730 = vmatprep.subr.bf16.mxu0 %v531
    %731 = vmatpush1.bf16.msra.mxu0 %v530
    %732 = vmatprep.subr.bf16.mxu0 %v533
    %733 = vmatpush1.bf16.msra.mxu0 %v532
    %734 = vmatprep.subr.bf16.mxu0 %v535
    %735 = vmatpush1.bf16.msra.mxu0 %v534
    %736 = vmatprep.subr.bf16.mxu0 %v537
    %737 = vmatpush1.bf16.msra.mxu0 %v536
    %738 = vmatprep.subr.bf16.mxu0 %v539
    %739 = vmatpush1.bf16.msra.mxu0 %v538
    %740 = vmatprep.mubr.bf16.mxu0 %v98
    %741 = vmatmul.mubr.bf16.gmra.mrb[0].mxu0 %v97
    %v742 = vpop.f32.mrb[0].mxu0
    %v743 = vadd.f32 %v207, %v742
    %v744 = vpop.f32.mrb[0].mxu0
    %v745 = vadd.f32 %v211, %v744
    %v746 = vpop.f32.mrb[0].mxu0
    %v747 = vadd.f32 %v207, %v746
    %v748 = vpop.f32.mrb[0].mxu0
    %v749 = vadd.f32 %v211, %v748
    %750 = vdwg.mxu0
    %751 = vmatprep.subr.bf16.mxu0 %v541
    %752 = vmatpush1.bf16.msra.mxu0 %v540
    %753 = vmatprep.subr.bf16.mxu0 %v543
    %754 = vmatpush1.bf16.msra.mxu0 %v542
    %755 = vmatprep.subr.bf16.mxu0 %v545
    %756 = vmatpush1.bf16.msra.mxu0 %v544
    %757 = vmatprep.subr.bf16.mxu0 %v547
    %758 = vmatpush1.bf16.msra.mxu0 %v546
    %759 = vmatprep.subr.bf16.mxu0 %v549
    %760 = vmatpush1.bf16.msra.mxu0 %v548
    %761 = vmatprep.subr.bf16.mxu0 %v551
    %762 = vmatpush1.bf16.msra.mxu0 %v550
    %763 = vmatprep.subr.bf16.mxu0 %v553
    %764 = vmatpush1.bf16.msra.mxu0 %v552
    %765 = vmatprep.subr.bf16.mxu0 %v555
    %766 = vmatpush1.bf16.msra.mxu0 %v554
    %767 = vmatprep.subr.bf16.mxu0 %v557
    %768 = vmatpush1.bf16.msra.mxu0 %v556
    %769 = vmatprep.subr.bf16.mxu0 %v559
    %770 = vmatpush1.bf16.msra.mxu0 %v558
    %771 = vmatprep.subr.bf16.mxu0 %v561
    %772 = vmatpush1.bf16.msra.mxu0 %v560
    %773 = vmatprep.subr.bf16.mxu0 %v563
    %774 = vmatpush1.bf16.msra.mxu0 %v562
    %775 = vmatprep.subr.bf16.mxu0 %v565
    %776 = vmatpush1.bf16.msra.mxu0 %v564
    %777 = vmatprep.subr.bf16.mxu0 %v567
    %778 = vmatpush1.bf16.msra.mxu0 %v566
    %779 = vmatprep.subr.bf16.mxu0 %v569
    %780 = vmatpush1.bf16.msra.mxu0 %v568
    %781 = vmatprep.subr.bf16.mxu0 %v571
    %782 = vmatpush1.bf16.msra.mxu0 %v570
    %783 = vmatprep.mubr.bf16.mxu0 %v100
    %784 = vmatmul.mubr.bf16.gmra.mrb[0].mxu0 %v99
    %v785 = vpop.f32.mrb[0].mxu0
    %v786 = vadd.f32 %v743, %v785
    %v787 = vpop.f32.mrb[0].mxu0
    %v788 = vadd.f32 %v745, %v787
    %v789 = vpop.f32.mrb[0].mxu0
    %v790 = vadd.f32 %v747, %v789
    %v791 = vpop.f32.mrb[0].mxu0
    %v792 = vadd.f32 %v749, %v791
    %793 = vdwg.mxu0
    %794 = vmatprep.subr.bf16.mxu0 %v573
    %795 = vmatpush1.bf16.msra.mxu0 %v572
    %796 = vmatprep.subr.bf16.mxu0 %v575
    %797 = vmatpush1.bf16.msra.mxu0 %v574
    %798 = vmatprep.subr.bf16.mxu0 %v577
    %799 = vmatpush1.bf16.msra.mxu0 %v576
    %800 = vmatprep.subr.bf16.mxu0 %v579
    %801 = vmatpush1.bf16.msra.mxu0 %v578
    %802 = vmatprep.subr.bf16.mxu0 %v581
    %803 = vmatpush1.bf16.msra.mxu0 %v580
    %804 = vmatprep.subr.bf16.mxu0 %v583
    %805 = vmatpush1.bf16.msra.mxu0 %v582
    %806 = vmatprep.subr.bf16.mxu0 %v585
    %807 = vmatpush1.bf16.msra.mxu0 %v584
    %808 = vmatprep.subr.bf16.mxu0 %v587
    %809 = vmatpush1.bf16.msra.mxu0 %v586
    %810 = vmatprep.subr.bf16.mxu0 %v589
    %811 = vmatpush1.bf16.msra.mxu0 %v588
    %812 = vmatprep.subr.bf16.mxu0 %v591
    %813 = vmatpush1.bf16.msra.mxu0 %v590
    %814 = vmatprep.subr.bf16.mxu0 %v593
    %815 = vmatpush1.bf16.msra.mxu0 %v592
    %816 = vmatprep.subr.bf16.mxu0 %v595
    %817 = vmatpush1.bf16.msra.mxu0 %v594
    %818 = vmatprep.subr.bf16.mxu0 %v597
    %819 = vmatpush1.bf16.msra.mxu0 %v596
    %820 = vmatprep.subr.bf16.mxu0 %v599
    %821 = vmatpush1.bf16.msra.mxu0 %v598
    %822 = vmatprep.subr.bf16.mxu0 %v601
    %823 = vmatpush1.bf16.msra.mxu0 %v600
    %824 = vmatprep.subr.bf16.mxu0 %v603
    %825 = vmatpush1.bf16.msra.mxu0 %v602
    %826 = vmatprep.mubr.bf16.mxu0 %v102
    %827 = vmatmul.mubr.bf16.gmra.mrb[0].mxu0 %v101
    %v828 = vpop.f32.mrb[0].mxu0
    %v829 = vadd.f32 %v786, %v828
    %v830 = vpop.f32.mrb[0].mxu0
    %v831 = vadd.f32 %v788, %v830
    %v832 = vpop.f32.mrb[0].mxu0
    %v833 = vadd.f32 %v790, %v832
    %v834 = vpop.f32.mrb[0].mxu0
    %v835 = vadd.f32 %v792, %v834
    %836 = vdwg.mxu0
    %837 = vmatprep.subr.bf16.mxu0 %v605
    %838 = vmatpush1.bf16.msra.mxu0 %v604
    %839 = vmatprep.subr.bf16.mxu0 0
    %840 = vmatpush1.bf16.msra.mxu0 0
    %841 = vmatprep.subr.bf16.mxu0 0
    %842 = vmatpush1.bf16.msra.mxu0 0
    %843 = vmatprep.subr.bf16.mxu0 0
    %844 = vmatpush1.bf16.msra.mxu0 0
    %845 = vmatprep.subr.bf16.mxu0 0
    %846 = vmatpush1.bf16.msra.mxu0 0
    %847 = vmatprep.subr.bf16.mxu0 0
    %848 = vmatpush1.bf16.msra.mxu0 0
    %849 = vmatprep.subr.bf16.mxu0 0
    %850 = vmatpush1.bf16.msra.mxu0 0
    %851 = vmatprep.subr.bf16.mxu0 0
    %852 = vmatpush1.bf16.msra.mxu0 0
    %853 = vmatprep.subr.bf16.mxu0 0
    %854 = vmatpush1.bf16.msra.mxu0 0
    %855 = vmatprep.subr.bf16.mxu0 0
    %856 = vmatpush1.bf16.msra.mxu0 0
    %857 = vmatprep.subr.bf16.mxu0 0
    %858 = vmatpush1.bf16.msra.mxu0 0
    %859 = vmatprep.subr.bf16.mxu0 0
    %860 = vmatpush1.bf16.msra.mxu0 0
    %861 = vmatprep.subr.bf16.mxu0 0
    %862 = vmatpush1.bf16.msra.mxu0 0
    %863 = vmatprep.subr.bf16.mxu0 0
    %864 = vmatpush1.bf16.msra.mxu0 0
    %865 = vmatprep.subr.bf16.mxu0 0
    %866 = vmatpush1.bf16.msra.mxu0 0
    %867 = vmatprep.subr.bf16.mxu0 0
    %868 = vmatpush1.bf16.msra.mxu0 0
    %869 = vmatprep.mubr.bf16.mxu0 0
    %870 = vmatmul.mubr.bf16.gmra.mrb[0].mxu0 %v706
    %v871 = vpop.f32.mrb[0].mxu0
    %v872 = vadd.f32 %v829, %v871
    %v873 = vpop.f32.mrb[0].mxu0
    %v874 = vadd.f32 %v831, %v873
    %v875 = vpop.f32.mrb[0].mxu0
    %v876 = vadd.f32 %v833, %v875
    %v877 = vpop.f32.mrb[0].mxu0
    %v878 = vadd.f32 %v835, %v877
    %879 = vdwg.mxu0
    %v880 = vmax.f32 %v872, 0.0
    %v881 = vmax.f32 %v874, 0.0
    %v882 = vmax.f32 %v876, 0.0
    %v883 = vmax.f32 %v878, 0.0
    %v884 = vpack.c.bf16 %v882, %v880
    %v885 = vpack.c.bf16 %v883, %v881
    %v886 = vld [vmem:[#allocation7] sm:$0xf]
    %v887 = vld [vmem:[#allocation7 + $0x4] sm:$0xf]
    %v888 = vld [vmem:[#allocation7 + $0x8] sm:$0xf]
    %v889 = vld [vmem:[#allocation7 + $0xc] sm:$0xf]
    %v890 = vld [vmem:[#allocation7 + $0x10] sm:$0xf]
    %v891 = vld [vmem:[#allocation7 + $0x14] sm:$0xf]
    %v892 = vld [vmem:[#allocation7 + $0x18] sm:$0xf]
    %v893 = vld [vmem:[#allocation7 + $0x1c] sm:$0xf]
    %v894 = vld [vmem:[#allocation7 + $0x20] sm:$0xf]
    %v895 = vld [vmem:[#allocation7 + $0x24] sm:$0xf]
    %v896 = vld [vmem:[#allocation7 + $0x28] sm:$0xf]
    %v897 = vld [vmem:[#allocation7 + $0x2c] sm:$0xf]
    %v898 = vld [vmem:[#allocation7 + $0x30] sm:$0xf]
    %v899 = vld [vmem:[#allocation7 + $0x34] sm:$0xf]
    %v900 = vld [vmem:[#allocation7 + $0x38] sm:$0xf]
    %v901 = vld [vmem:[#allocation7 + $0x3c] sm:$0xf]
    %v902 = vld [vmem:[#allocation7 + $0x40] sm:$0xf]
    %v903 = vld [vmem:[#allocation7 + $0x44] sm:$0xf]
    %v904 = vld [vmem:[#allocation7 + $0x48] sm:$0xf]
    %v905 = vld [vmem:[#allocation7 + $0x4c] sm:$0xf]
    %v906 = vld [vmem:[#allocation7 + $0x50] sm:$0xf]
    %v907 = vld [vmem:[#allocation7 + $0x54] sm:$0xf]
    %v908 = vld [vmem:[#allocation7 + $0x58] sm:$0xf]
    %v909 = vld [vmem:[#allocation7 + $0x5c] sm:$0xf]
    %v910 = vld [vmem:[#allocation7 + $0x60] sm:$0xf]
    %v911 = vld [vmem:[#allocation7 + $0x64] sm:$0xf]
    %v912 = vld [vmem:[#allocation7 + $0x68] sm:$0xf]
    %v913 = vld [vmem:[#allocation7 + $0x6c] sm:$0xf]
    %v914 = vld [vmem:[#allocation7 + $0x70] sm:$0xf]
    %v915 = vld [vmem:[#allocation7 + $0x74] sm:$0xf]
    %v916 = vld [vmem:[#allocation7 + $0x78] sm:$0xf]
    %v917 = vld [vmem:[#allocation7 + $0x7c] sm:$0xf]
    %v918 = vld [vmem:[%s4] sm:$0x1]
    %v920 = vlaneseq
    %v921 = vshrl.u32 %v920, 7
    %v922 = vsub.s32 0, %v921
    %v923 = vrot.slane %v918, %v922
    %v957 = vunpack.c.l.b16 %v886
    %v958 = vunpack.c.l.b16 %v887
    %v959 = vunpack.c.l.b16 %v888
    %v960 = vunpack.c.l.b16 %v889
    %v961 = vunpack.c.l.b16 %v890
    %v962 = vunpack.c.l.b16 %v891
    %v963 = vunpack.c.l.b16 %v892
    %v964 = vunpack.c.l.b16 %v893
    %v965 = vunpack.c.l.b16 %v894
    %v966 = vunpack.c.l.b16 %v895
    %v967 = vunpack.c.l.b16 %v896
    %v968 = vunpack.c.l.b16 %v897
    %v969 = vunpack.c.l.b16 %v898
    %v970 = vunpack.c.l.b16 %v899
    %v971 = vunpack.c.l.b16 %v900
    %v972 = vunpack.c.l.b16 %v901
    %v973 = vunpack.c.l.b16 %v902
    %v974 = vunpack.c.l.b16 %v903
    %v975 = vunpack.c.l.b16 %v904
    %v976 = vunpack.c.l.b16 %v905
    %v977 = vunpack.c.l.b16 %v906
    %v978 = vunpack.c.l.b16 %v907
    %v979 = vunpack.c.l.b16 %v908
    %v980 = vunpack.c.l.b16 %v909
    %v981 = vunpack.c.l.b16 %v910
    %v982 = vunpack.c.l.b16 %v911
    %v983 = vunpack.c.l.b16 %v912
    %v984 = vunpack.c.l.b16 %v913
    %v985 = vunpack.c.l.b16 %v914
    %v986 = vunpack.c.l.b16 %v915
    %v987 = vunpack.c.l.b16 %v916
    %v988 = vunpack.c.l.b16 %v917
    %v989 = vpack.c.b16 %v958, %v957
    %v990 = vpack.c.b16 %v960, %v959
    %v991 = vpack.c.b16 %v962, %v961
    %v992 = vpack.c.b16 %v964, %v963
    %v993 = vpack.c.b16 %v966, %v965
    %v994 = vpack.c.b16 %v968, %v967
    %v995 = vpack.c.b16 %v970, %v969
    %v996 = vpack.c.b16 %v972, %v971
    %v997 = vpack.c.b16 %v974, %v973
    %v998 = vpack.c.b16 %v976, %v975
    %v999 = vpack.c.b16 %v978, %v977
    %v1000 = vpack.c.b16 %v980, %v979
    %v1001 = vpack.c.b16 %v982, %v981
    %v1002 = vpack.c.b16 %v984, %v983
    %v1003 = vpack.c.b16 %v986, %v985
    %v1004 = vpack.c.b16 %v988, %v987
    %1021 = vmatprep.subr.bf16.mxu0 0
    %1022 = vmatpush1.bf16.msra.mxu0 %v989
    %1023 = vmatprep.subr.bf16.mxu0 0
    %1024 = vmatpush1.bf16.msra.mxu0 %v990
    %1025 = vmatprep.subr.bf16.mxu0 0
    %1026 = vmatpush1.bf16.msra.mxu0 %v991
    %1027 = vmatprep.subr.bf16.mxu0 0
    %1028 = vmatpush1.bf16.msra.mxu0 %v992
    %1029 = vmatprep.subr.bf16.mxu0 0
    %1030 = vmatpush1.bf16.msra.mxu0 %v993
    %1031 = vmatprep.subr.bf16.mxu0 0
    %1032 = vmatpush1.bf16.msra.mxu0 %v994
    %1033 = vmatprep.subr.bf16.mxu0 0
    %1034 = vmatpush1.bf16.msra.mxu0 %v995
    %1035 = vmatprep.subr.bf16.mxu0 0
    %1036 = vmatpush1.bf16.msra.mxu0 %v996
    %1037 = vmatprep.subr.bf16.mxu0 0
    %1038 = vmatpush1.bf16.msra.mxu0 %v997
    %1039 = vmatprep.subr.bf16.mxu0 0
    %1040 = vmatpush1.bf16.msra.mxu0 %v998
    %1041 = vmatprep.subr.bf16.mxu0 0
    %1042 = vmatpush1.bf16.msra.mxu0 %v999
    %1043 = vmatprep.subr.bf16.mxu0 0
    %1044 = vmatpush1.bf16.msra.mxu0 %v1000
    %1045 = vmatprep.subr.bf16.mxu0 0
    %1046 = vmatpush1.bf16.msra.mxu0 %v1001
    %1047 = vmatprep.subr.bf16.mxu0 0
    %1048 = vmatpush1.bf16.msra.mxu0 %v1002
    %1049 = vmatprep.subr.bf16.mxu0 0
    %1050 = vmatpush1.bf16.msra.mxu0 %v1003
    %1051 = vmatprep.subr.bf16.mxu0 0
    %1052 = vmatpush1.bf16.msra.mxu0 %v1004
    %1053 = vmatprep.mubr.bf16.mxu0 %v885
    %1054 = vmatmul.mubr.bf16.gmra.mrb[0].mxu0 %v884
    %v1055 = vpop.f32.mrb[0].mxu0
    %v1056 = vadd.f32 %v923, %v1055
    %v1057 = vpop.f32.mrb[0].mxu0
    %v1058 = vpop.f32.mrb[0].mxu0
    %v1059 = vadd.f32 %v923, %v1058
    %v1060 = vpop.f32.mrb[0].mxu0
    %1061 = vdwg.mxu0
    %v1062 = vmax.f32 %v1056, 0.0
    %v1063 = vmax.f32 %v1059, 0.0
    %v1064 = vpack.c.bf16 %v1063, %v1062
    %v1065 = vld [vmem:[#allocation8] sm:$0xf]
    %v1066 = vld [vmem:[#allocation8 + $0x4] sm:$0xf]
    %v1067 = vld [vmem:[#allocation8 + $0x8] sm:$0xf]
    %v1068 = vld [vmem:[#allocation8 + $0xc] sm:$0xf]
    %v1069 = vld [vmem:[#allocation8 + $0x10] sm:$0xf]
    %v1070 = vld [vmem:[#allocation8 + $0x14] sm:$0xf]
    %v1071 = vld [vmem:[#allocation8 + $0x18] sm:$0xf]
    %v1072 = vld [vmem:[#allocation8 + $0x1c] sm:$0xf]
    %v1073 = vld [vmem:[#allocation8 + $0x20] sm:$0xf]
    %v1074 = vld [vmem:[#allocation8 + $0x24] sm:$0xf]
    %v1075 = vld [vmem:[#allocation8 + $0x28] sm:$0xf]
    %v1076 = vld [vmem:[#allocation8 + $0x2c] sm:$0xf]
    %v1077 = vld [vmem:[#allocation8 + $0x30] sm:$0xf]
    %v1078 = vld [vmem:[#allocation8 + $0x34] sm:$0xf]
    %v1079 = vld [vmem:[#allocation8 + $0x38] sm:$0xf]
    %v1080 = vld [vmem:[#allocation8 + $0x3c] sm:$0xf]
    %v1081 = vld [vmem:[%s6] sm:$0x1]
    %v1083 = vlaneseq
    %v1084 = vshrl.u32 %v1083, 7
    %v1085 = vsub.s32 0, %v1084
    %v1086 = vrot.slane %v1081, %v1085
    %v1104 = vunpack.c.l.b16 %v1065
    %v1105 = vunpack.c.l.b16 %v1066
    %v1106 = vunpack.c.l.b16 %v1067
    %v1107 = vunpack.c.l.b16 %v1068
    %v1108 = vunpack.c.l.b16 %v1069
    %v1109 = vunpack.c.l.b16 %v1070
    %v1110 = vunpack.c.l.b16 %v1071
    %v1111 = vunpack.c.l.b16 %v1072
    %v1112 = vunpack.c.l.b16 %v1073
    %v1113 = vunpack.c.l.b16 %v1074
    %v1114 = vunpack.c.l.b16 %v1075
    %v1115 = vunpack.c.l.b16 %v1076
    %v1116 = vunpack.c.l.b16 %v1077
    %v1117 = vunpack.c.l.b16 %v1078
    %v1118 = vunpack.c.l.b16 %v1079
    %v1119 = vunpack.c.l.b16 %v1080
    %v1120 = vpack.c.b16 %v1105, %v1104
    %v1121 = vpack.c.b16 %v1107, %v1106
    %v1122 = vpack.c.b16 %v1109, %v1108
    %v1123 = vpack.c.b16 %v1111, %v1110
    %v1124 = vpack.c.b16 %v1113, %v1112
    %v1125 = vpack.c.b16 %v1115, %v1114
    %v1126 = vpack.c.b16 %v1117, %v1116
    %v1127 = vpack.c.b16 %v1119, %v1118
    %1136 = vmatprep.subr.bf16.mxu0 0
    %1137 = vmatpush1.bf16.msra.mxu0 %v1120
    %1138 = vmatprep.subr.bf16.mxu0 0
    %1139 = vmatpush1.bf16.msra.mxu0 %v1121
    %1140 = vmatprep.subr.bf16.mxu0 0
    %1141 = vmatpush1.bf16.msra.mxu0 %v1122
    %1142 = vmatprep.subr.bf16.mxu0 0
    %1143 = vmatpush1.bf16.msra.mxu0 %v1123
    %1144 = vmatprep.subr.bf16.mxu0 0
    %1145 = vmatpush1.bf16.msra.mxu0 %v1124
    %1146 = vmatprep.subr.bf16.mxu0 0
    %1147 = vmatpush1.bf16.msra.mxu0 %v1125
    %1148 = vmatprep.subr.bf16.mxu0 0
    %1149 = vmatpush1.bf16.msra.mxu0 %v1126
    %1150 = vmatprep.subr.bf16.mxu0 0
    %1151 = vmatpush1.bf16.msra.mxu0 %v1127
    %1152 = vmatprep.subr.bf16.mxu0 0
    %1153 = vmatpush1.bf16.msra.mxu0 0
    %1154 = vmatprep.subr.bf16.mxu0 0
    %1155 = vmatpush1.bf16.msra.mxu0 0
    %1156 = vmatprep.subr.bf16.mxu0 0
    %1157 = vmatpush1.bf16.msra.mxu0 0
    %1158 = vmatprep.subr.bf16.mxu0 0
    %1159 = vmatpush1.bf16.msra.mxu0 0
    %1160 = vmatprep.subr.bf16.mxu0 0
    %1161 = vmatpush1.bf16.msra.mxu0 0
    %1162 = vmatprep.subr.bf16.mxu0 0
    %1163 = vmatpush1.bf16.msra.mxu0 0
    %1164 = vmatprep.subr.bf16.mxu0 0
    %1165 = vmatpush1.bf16.msra.mxu0 0
    %1166 = vmatprep.subr.bf16.mxu0 0
    %1167 = vmatpush1.bf16.msra.mxu0 0
    %1168 = vmatprep.mubr.bf16.mxu0 0
    %1169 = vmatmul.mubr.bf16.gmra.mrb[0].mxu0 %v1064
    %v1170 = vpop.f32.mrb[0].mxu0
    %v1171 = vadd.f32 %v1086, %v1170
    %v1172 = vpop.f32.mrb[0].mxu0
    %v1173 = vpop.f32.mrb[0].mxu0
    %v1174 = vadd.f32 %v1086, %v1173
    %v1175 = vpop.f32.mrb[0].mxu0
    %1176 = vdwg.mxu0
    %1177 = vmax.xlane.f32.xlu0 %v1171
    %v1178 = vpop.xlane.xlu0 %1177
    %1179 = vmax.xlane.f32.xlu0 %v1174
    %v1180 = vpop.xlane.xlu0 %1179
    %v1181 = vsub.f32 %v1171, %v1178
    %v1182 = vsub.f32 %v1174, %v1180
    %v1183 = vmul.f32 %v1181, 1.442695
    %v1184 = vpow.pop %v1183
    %v1185 = vmul.f32 %v1182, 1.442695
    %v1186 = vpow.pop %v1185
    %1187 = vadd.xlane.f32.xlu0 %v1184
    %v1188 = vpop.xlane.xlu0 %1187
    %1189 = vadd.xlane.f32.xlu0 %v1186
    %v1190 = vpop.xlane.xlu0 %1189
    %v1191 = vlog2.pop %v1188
    %v1192 = vmul.f32 %v1191, 0.6931472
    %v1193 = vlog2.pop %v1190
    %v1194 = vmul.f32 %v1193, 0.6931472
    %v1195 = vsub.f32 %v1181, %v1192
    %v1196 = vsub.f32 %v1182, %v1194
    %v1197 = vpack.c.bf16 %v1196, %v1195
    %v1199 = vunpack.c.l.b16 %v1197
    %v1200 = vunpack.c.h.b16 %v1197
    %v1201 = vpack.c.b16 %v1199, %v1199
    %v1202 = vpack.c.b16 %v1200, %v1200
    %1205 = vst [vmem:[#allocation10] sm:$0xf] %v1201
    %1206 = vst [vmem:[#allocation10 + $0x4] sm:$0xf] %v1202
    // Predicated region
    $region46: #{tpu_custom_call.1} parent=1 // pred_check
      _
    $region47: #{tpu_custom_call.1} parent=1 // pred_check_branch
      %1208 = sbr.rel (0) target = $region49
    $region48: #{tpu_custom_call.1} parent=1 // pred_region
      %s1210 = ssub.s32 128, 128
      %1211 = vsyncadd [#allocation4], %s1210
      %s1212 = sshll.u32 [#allocation10], 4
      %s1213 = int_to_ptr.vmem [resolvable:$true] %s1212
      %1218 = dma.vmem_to_hbm [thread:$0]  %s1213, 128, %s7, [#allocation4], 64, 64, 4
    $region49: #{tpu_custom_call.1} parent=1 // pred_fallthru
      _
    // Predicated region
    $region50: #{tpu_custom_call.1} parent=1 // pred_check
      _
    $region51: #{tpu_custom_call.1} parent=1 // pred_check_branch
      %1220 = sbr.rel (0) target = $region53
    $region52: #{tpu_custom_call.1} parent=1 // pred_region
      %1221 = dma.done [#allocation4], 128
    $region53: #{tpu_custom_call.1} parent=1 // pred_fallthru
      _
    %1222 = vsyncpa [#allocation3], 1
    %1223 = vsyncpa [#allocation6], 1
    %1224 = vsyncpa [#allocation9], 1
    %1225 = vsyncpa [#allocation4], 1

</llo_original>
